<compile_context>
chip_gen: v7x
topology: tpu7x:2x2x1
jax: 0.10.0
libtpu: 0.0.40
codegen_flags: <defaults>
</compile_context>

<pallas_src>
import functools

import jax
import jax.numpy as jnp
import numpy as np
from jax.experimental import pallas as pl
from jax.experimental.pallas import tpu as pltpu


def _round_up(x, m):
    return (x + m - 1) // m * m


def _pick_hidden_tile(hp, tn):
    """Largest multiple of 128 that divides hp and is <= max(tn, 128)."""
    cand = min(max(tn, 128), hp)
    cand = (cand // 128) * 128
    while hp % cand != 0:
        cand -= 128
    return cand


def _sae_kernel(x_ref, enc_wt_ref, enc_b_ref, dec_wt_ref, dec_b_ref,
                dec_out_ref, enc_out_ref, acc_ref):
    h = pl.program_id(1)
    last_h = pl.num_programs(1) - 1

    x = x_ref[...]                                   # (tb, Ip)  native dtype
    dec_b = dec_b_ref[...]                           # (1, Ip)
    x_inp = x - dec_b

    # Encoder slab: MXU matmul (native-dtype operands, f32 accumulation),
    # bias + ReLU on the VPU.
    pre = jnp.dot(x_inp, enc_wt_ref[...],
                  preferred_element_type=jnp.float32)
    pre = pre + enc_b_ref[...].astype(jnp.float32)
    encoded = jnp.maximum(pre, 0.0)                  # (tb, tn) f32
    enc_out_ref[...] = encoded.astype(enc_out_ref.dtype)

    # Decoder: accumulate this hidden slab's contribution in f32 scratch.
    # dec_bias is added exactly once (at init of the accumulator).
    @pl.when(h == 0)
    def _():
        acc_ref[...] = jnp.broadcast_to(dec_b.astype(jnp.float32),
                                        acc_ref.shape)

    acc_ref[...] += jnp.dot(encoded.astype(dec_wt_ref.dtype), dec_wt_ref[...],
                            preferred_element_type=jnp.float32)

    @pl.when(h == last_h)
    def _():
        dec_out_ref[...] = acc_ref[...].astype(dec_out_ref.dtype)


@functools.partial(jax.jit, static_argnames=("out_feats", "tb", "tn"))
def _sae_forward(x, enc_wt, enc_b2, dec_wt, dec_b2, *, out_feats, tb, tn):
    B, in_feats = x.shape
    Ip, Hp = enc_wt.shape                # padded in-dim / hidden-dim (x128)

    # Effective batch tile: multiple of 8, capped by (padded) batch.
    tb_eff = min(tb, _round_up(B, 8))
    tb_eff = _round_up(tb_eff, 8)
    Bp = _round_up(B, tb_eff)

    # Pad x to (Bp, Ip): zero columns meet zero weight rows -> exact.
    if Bp != B or Ip != in_feats:
        x = jnp.pad(x, ((0, Bp - B), (0, Ip - in_feats)))

    # Effective hidden tile: multiple of 128 dividing Hp.
    tn_eff = _pick_hidden_tile(Hp, tn)

    grid = (Bp // tb_eff, Hp // tn_eff)

    # VMEM budget: double-buffered inputs + outputs + f32 accumulator scratch.
    xb = x.dtype.itemsize
    wb = enc_wt.dtype.itemsize
    need = (2 * (tb_eff * Ip * xb                # x tile
                 + Ip * tn_eff * wb              # enc_wt slab
                 + tn_eff * wb                   # enc_b slab
                 + tn_eff * Ip * wb              # dec_wt slab
                 + Ip * wb)                      # dec_b
            + 2 * (tb_eff * Ip + tb_eff * tn_eff) * xb   # outputs
            + tb_eff * Ip * 4)                            # acc scratch
    vmem_limit = int(min(max(2 * need + (4 << 20), 32 << 20), 64 << 20))

    flops = 2 * Bp * Ip * Hp * 2                 # two matmuls
    bytes_accessed = (xb * (2 * Bp * Ip + Bp * Hp)
                      + wb * (2 * Ip * Hp + Hp + Ip))

    decoded, encoded = pl.pallas_call(
        _sae_kernel,
        out_shape=(
            jax.ShapeDtypeStruct((Bp, Ip), x.dtype),
            jax.ShapeDtypeStruct((Bp, Hp), x.dtype),
        ),
        grid_spec=pltpu.PrefetchScalarGridSpec(
            num_scalar_prefetch=0,
            grid=grid,
            in_specs=[
                pl.BlockSpec((tb_eff, Ip), lambda i, h: (i, 0)),      # x
                pl.BlockSpec((Ip, tn_eff), lambda i, h: (0, h)),      # enc_wt
                pl.BlockSpec((1, tn_eff), lambda i, h: (0, h)),       # enc_b
                pl.BlockSpec((tn_eff, Ip), lambda i, h: (h, 0)),      # dec_wt
                pl.BlockSpec((1, Ip), lambda i, h: (0, 0)),           # dec_b
            ],
            out_specs=[
                pl.BlockSpec((tb_eff, Ip), lambda i, h: (i, 0)),      # decoded
                pl.BlockSpec((tb_eff, tn_eff), lambda i, h: (i, h)),  # encoded
            ],
            scratch_shapes=[pltpu.VMEM((tb_eff, Ip), jnp.float32)],
        ),
        compiler_params=pltpu.CompilerParams(
            dimension_semantics=("parallel", "arbitrary"),
            vmem_limit_bytes=vmem_limit),
        cost_estimate=pl.CostEstimate(flops=flops, transcendentals=0,
                                      bytes_accessed=bytes_accessed),
    )(x, enc_wt, enc_b2, dec_wt, dec_b2)

    return decoded[:B, :in_feats], encoded[:B, :out_feats]


def prepare_params(enc_w, enc_b, dec_w, dec_b, *, multiple=128):
    """One-time parameter prep (outside the jitted forward): transpose weights
    and zero-pad BOTH the hidden dim and in_feats to multiples of 128 so every
    tile is (8,128)-aligned and lane-dense. Zero padding is exact: relu(0)=0,
    zero weight rows/cols add 0, and padded output columns are sliced off."""
    out_feats, in_feats = enc_w.shape
    Hp = _round_up(out_feats, multiple)
    Ip = _round_up(in_feats, multiple)
    hpad = Hp - out_feats
    ipad = Ip - in_feats
    enc_wt = enc_w.T                              # [in, H]
    dec_wt = dec_w.T                              # [H, in]
    enc_b_p = enc_b
    dec_b_p = dec_b
    if hpad or ipad:
        enc_wt = jnp.pad(enc_wt, ((0, ipad), (0, hpad)))
        dec_wt = jnp.pad(dec_wt, ((0, hpad), (0, ipad)))
        enc_b_p = jnp.pad(enc_b, (0, hpad))
        dec_b_p = jnp.pad(dec_b, (0, ipad))
    return dict(
        enc_wt=enc_wt,                            # [Ip, Hp]
        enc_b=enc_b_p.reshape(1, Hp),
        dec_wt=dec_wt,                            # [Hp, Ip]
        dec_b=dec_b_p.reshape(1, Ip),
        out_feats=int(out_feats),
    )


def sparse_autoenc_relu_forward(x, params, *, tb=256, tn=512):
    """x: [B, in_feats]; params from prepare_params(). Returns (decoded, encoded, x)."""
    decoded, encoded = _sae_forward(
        x, params["enc_wt"], params["enc_b"], params["dec_wt"], params["dec_b"],
        out_feats=params["out_feats"], tb=tb, tn=tn)
    return decoded, encoded, x


def init_params(key, in_feats, out_feats):
    """Deterministic init mimicking nn.Linear (uniform +-1/sqrt(fan_in)),
    with decoder weight rows L2-normalized along dim=1."""
    k1, k2, k3, k4 = jax.random.split(key, 4)
    enc_bound = 1.0 / np.sqrt(in_feats)
    dec_bound = 1.0 / np.sqrt(out_feats)
    enc_w = jax.random.uniform(k1, (out_feats, in_feats), jnp.float32,
                               -enc_bound, enc_bound)
    enc_b = jax.random.uniform(k2, (out_feats,), jnp.float32,
                               -enc_bound, enc_bound)
    dec_w = jax.random.uniform(k3, (in_feats, out_feats), jnp.float32,
                               -dec_bound, dec_bound)
    dec_b = jax.random.uniform(k4, (in_feats,), jnp.float32,
                               -dec_bound, dec_bound)
    # F.normalize(dec.weight, p=2, dim=1): unit L2 norm of each row.
    norm = jnp.sqrt(jnp.sum(dec_w * dec_w, axis=1, keepdims=True))
    dec_w = dec_w / jnp.maximum(norm, 1e-12)
    return enc_w, enc_b, dec_w, dec_b


def reference_forward(x, enc_w, enc_b, dec_w, dec_b):
    x_inp = x - dec_b
    encoded = jnp.maximum(x_inp @ enc_w.T + enc_b, 0.0)
    decoded = encoded @ dec_w.T + dec_b
    return decoded, encoded, x


if __name__ == "__main__":
    # Small but non-trivial shapes: batch not a multiple of 8, hidden and
    # in_feats not multiples of 128 -> exercises all padding/slicing paths.
    B, in_feats, out_feats = 12, 64, 200

    key = jax.random.PRNGKey(0)
    kx, kp = jax.random.split(key)
    x = jax.random.normal(kx, (B, in_feats), dtype=jnp.float32)
    enc_w, enc_b, dec_w, dec_b = init_params(kp, in_feats, out_feats)

    params = prepare_params(enc_w, enc_b, dec_w, dec_b)

    decoded, encoded, x_out = sparse_autoenc_relu_forward(x, params,
                                                          tb=256, tn=512)
    jax.block_until_ready((decoded, encoded, x_out))

    # Correctness check against a pure-JAX reference.
    ref_dec, ref_enc, ref_x = reference_forward(x, enc_w, enc_b, dec_w, dec_b)
    np.testing.assert_allclose(np.asarray(decoded), np.asarray(ref_dec),
                               rtol=1e-5, atol=1e-5)
    np.testing.assert_allclose(np.asarray(encoded), np.asarray(ref_enc),
                               rtol=1e-5, atol=1e-5)
    np.testing.assert_allclose(np.asarray(x_out), np.asarray(ref_x))

    print("KERNEL_OK")
</pallas_src>

<mosaic_0001>
module attributes {stable_mosaic.version = 11 : i64} {
  func.func @_sae_kernel(%arg0: i32, %arg1: i32, %arg2: memref<16x128xf32, #tpu.memory_space<vmem>>, %arg3: memref<128x256xf32, #tpu.memory_space<vmem>>, %arg4: memref<1x256xf32, #tpu.memory_space<vmem>>, %arg5: memref<256x128xf32, #tpu.memory_space<vmem>>, %arg6: memref<1x128xf32, #tpu.memory_space<vmem>>, %arg7: memref<16x128xf32, #tpu.memory_space<vmem>>, %arg8: memref<16x256xf32, #tpu.memory_space<vmem>>, %arg9: memref<16x128xf32, #tpu.memory_space<vmem>>) attributes {dimension_semantics = [#tpu.dimension_semantics<parallel>, #tpu.dimension_semantics<arbitrary>], iteration_bounds = array<i64: 1, 1>, scalar_prefetch = 0 : i64, scratch_operands = 1 : i64, tpu.core_type = #tpu.core_type<tc>, window_params = [{transform_indices = @transform_0, window_bounds = array<i64: 16, 128>}, {transform_indices = @transform_1, window_bounds = array<i64: 128, 256>}, {transform_indices = @transform_2, window_bounds = array<i64: 1, 256>}, {transform_indices = @transform_3, window_bounds = array<i64: 256, 128>}, {pipeline_mode = #tpu.pipeline_mode<synchronous>, transform_indices = @transform_4, window_bounds = array<i64: 1, 128>}, {transform_indices = @transform_5, window_bounds = array<i64: 16, 128>}, {transform_indices = @transform_6, window_bounds = array<i64: 16, 256>}]} {
    %c0 = arith.constant 0 : index
    %c0_0 = arith.constant 0 : index
    %0 = vector.load %arg2[%c0, %c0_0] : memref<16x128xf32, #tpu.memory_space<vmem>>, vector<16x128xf32>
    %c0_1 = arith.constant 0 : index
    %c0_2 = arith.constant 0 : index
    %1 = vector.load %arg6[%c0_1, %c0_2] : memref<1x128xf32, #tpu.memory_space<vmem>>, vector<1x128xf32>
    %2 = vector.broadcast %1 : vector<1x128xf32> to vector<16x128xf32>
    %3 = arith.subf %0, %2 : vector<16x128xf32>
    %c0_3 = arith.constant 0 : index
    %c0_4 = arith.constant 0 : index
    %4 = vector.load %arg3[%c0_3, %c0_4] : memref<128x256xf32, #tpu.memory_space<vmem>>, vector<128x256xf32>
    %cst = arith.constant dense<0.000000e+00> : vector<16x256xf32>
    %5 = tpu.matmul %3, %4, %cst {dimension_numbers = #tpu.dot_dimension_numbers<[1], [0], [0], [1], [0, 0, 1, 1], [], []>} : vector<16x128xf32>, vector<128x256xf32>, vector<16x256xf32> -> vector<16x256xf32>
    %c0_5 = arith.constant 0 : index
    %c0_6 = arith.constant 0 : index
    %6 = vector.load %arg4[%c0_5, %c0_6] : memref<1x256xf32, #tpu.memory_space<vmem>>, vector<1x256xf32>
    %7 = vector.broadcast %6 : vector<1x256xf32> to vector<16x256xf32>
    %8 = arith.addf %5, %7 : vector<16x256xf32>
    %cst_7 = arith.constant 0.000000e+00 : f32
    %9 = vector.broadcast %cst_7 : f32 to vector<16x256xf32>
    %10 = arith.maximumf %8, %9 : vector<16x256xf32>
    %c0_8 = arith.constant 0 : index
    %c0_9 = arith.constant 0 : index
    %11 = vector.load %arg8[%c0_8, %c0_9] : memref<16x256xf32, #tpu.memory_space<vmem>>, vector<16x256xf32>
    tpu.vector_store %arg8[%c0_8, %c0_9], %10 {strides = array<i32>} : memref<16x256xf32, #tpu.memory_space<vmem>>, vector<16x256xf32>,
    %c0_i32 = arith.constant 0 : i32
    %12 = arith.cmpi eq, %arg1, %c0_i32 : i32
    %13 = arith.extui %12 : i1 to i32
    %c0_i32_10 = arith.constant 0 : i32
    %14 = arith.cmpi ne, %13, %c0_i32_10 : i32
    scf.if %14 {
      %23 = vector.shape_cast %1 : vector<1x128xf32> to vector<1x128xf32>
      %24 = vector.broadcast %23 : vector<1x128xf32> to vector<16x128xf32>
      %c0_20 = arith.constant 0 : index
      %c0_21 = arith.constant 0 : index
      %25 = vector.load %arg9[%c0_20, %c0_21] : memref<16x128xf32, #tpu.memory_space<vmem>>, vector<16x128xf32>
      tpu.vector_store %arg9[%c0_20, %c0_21], %24 {strides = array<i32>} : memref<16x128xf32, #tpu.memory_space<vmem>>, vector<16x128xf32>,
    } else {
    }
    %c0_11 = arith.constant 0 : index
    %c0_12 = arith.constant 0 : index
    %15 = vector.load %arg9[%c0_11, %c0_12] : memref<16x128xf32, #tpu.memory_space<vmem>>, vector<16x128xf32>
    %c0_13 = arith.constant 0 : index
    %c0_14 = arith.constant 0 : index
    %16 = vector.load %arg5[%c0_13, %c0_14] : memref<256x128xf32, #tpu.memory_space<vmem>>, vector<256x128xf32>
    %cst_15 = arith.constant dense<0.000000e+00> : vector<16x128xf32>
    %17 = tpu.matmul %10, %16, %cst_15 {dimension_numbers = #tpu.dot_dimension_numbers<[1], [0], [0], [1], [0, 0, 1, 1], [], []>} : vector<16x256xf32>, vector<256x128xf32>, vector<16x128xf32> -> vector<16x128xf32>
    %18 = arith.addf %15, %17 : vector<16x128xf32>
    %c0_16 = arith.constant 0 : index
    %c0_17 = arith.constant 0 : index
    %19 = vector.load %arg9[%c0_16, %c0_17] : memref<16x128xf32, #tpu.memory_space<vmem>>, vector<16x128xf32>
    tpu.vector_store %arg9[%c0_16, %c0_17], %18 {strides = array<i32>} : memref<16x128xf32, #tpu.memory_space<vmem>>, vector<16x128xf32>,
    %c0_i32_18 = arith.constant 0 : i32
    %20 = arith.cmpi eq, %arg1, %c0_i32_18 : i32
    %21 = arith.extui %20 : i1 to i32
    %c0_i32_19 = arith.constant 0 : i32
    %22 = arith.cmpi ne, %21, %c0_i32_19 : i32
    scf.if %22 {
      %c0_20 = arith.constant 0 : index
      %c0_21 = arith.constant 0 : index
      %23 = vector.load %arg9[%c0_20, %c0_21] : memref<16x128xf32, #tpu.memory_space<vmem>>, vector<16x128xf32>
      %c0_22 = arith.constant 0 : index
      %c0_23 = arith.constant 0 : index
      %24 = vector.load %arg7[%c0_22, %c0_23] : memref<16x128xf32, #tpu.memory_space<vmem>>, vector<16x128xf32>
      tpu.vector_store %arg7[%c0_22, %c0_23], %23 {strides = array<i32>} : memref<16x128xf32, #tpu.memory_space<vmem>>, vector<16x128xf32>,
    } else {
    }
    return
  }
  func.func @transform_0(%arg0: i32, %arg1: i32) -> (i32, i32) {
    %c0_i32 = arith.constant 0 : i32
    %c0_i32_0 = arith.constant 0 : i32
    return %arg0, %c0_i32 : i32, i32
  }
  func.func @transform_1(%arg0: i32, %arg1: i32) -> (i32, i32) {
    %c0_i32 = arith.constant 0 : i32
    %c0_i32_0 = arith.constant 0 : i32
    return %c0_i32, %arg1 : i32, i32
  }
  func.func @transform_2(%arg0: i32, %arg1: i32) -> (i32, i32) {
    %c0_i32 = arith.constant 0 : i32
    %c0_i32_0 = arith.constant 0 : i32
    return %c0_i32, %arg1 : i32, i32
  }
  func.func @transform_3(%arg0: i32, %arg1: i32) -> (i32, i32) {
    %c0_i32 = arith.constant 0 : i32
    %c0_i32_0 = arith.constant 0 : i32
    return %arg1, %c0_i32 : i32, i32
  }
  func.func @transform_4(%arg0: i32, %arg1: i32) -> (i32, i32) {
    %c0_i32 = arith.constant 0 : i32
    %c0_i32_0 = arith.constant 0 : i32
    %c0_i32_1 = arith.constant 0 : i32
    return %c0_i32, %c0_i32_0 : i32, i32
  }
  func.func @transform_5(%arg0: i32, %arg1: i32) -> (i32, i32) {
    %c0_i32 = arith.constant 0 : i32
    %c0_i32_0 = arith.constant 0 : i32
    return %arg0, %c0_i32 : i32, i32
  }
  func.func @transform_6(%arg0: i32, %arg1: i32) -> (i32, i32) {
    %c0_i32 = arith.constant 0 : i32
    return %arg0, %arg1 : i32, i32
  }
}

</mosaic_0001>

<llo_original>
// kernel: _sae_forward.1
$region0: #{_sae_forward.1}
  #allocation0 [shape = 'u32[]', space=smem, size = 0x4, offset = 0x4, fixed_abs, tag = 'smem constant byte address 0x4 - core index']
  #allocation1 [shape = 'u32[144,128]{1,0:T(1,128)}', space=vmem, size = 0x12000, scoped, tag = 'internal scratch']
  #allocation2 [shape = 'f32[16,128]{1,0:T(8,128)}', space=vmem, size = 0x2000, scoped, tag = 'scratch operand']
  %s0 = inlined_call_operand.vmem [shape: f32[16,128], index: 0, kind: input, shape index: {}]
  %s1 = inlined_call_operand.hbm [shape: f32[128,256], index: 1, kind: input, shape index: {}]
  %s2 = inlined_call_operand.vmem [shape: f32[1,256], index: 2, kind: input, shape index: {}]
  %s3 = inlined_call_operand.hbm [shape: f32[256,128], index: 3, kind: input, shape index: {}]
  %s4 = inlined_call_operand.vmem [shape: f32[1,128], index: 4, kind: input, shape index: {}]
  %s5 = inlined_call_operand.hbm [shape: f32[16,128], index: 5, kind: output, shape index: {0}]
  %s6 = inlined_call_operand.hbm [shape: f32[16,256], index: 6, kind: output, shape index: {1}]
  %7 = xla_tuple %s5, %s6
  %s8 = sld [smem:[#allocation0]]
  $region54: #{_sae_forward.1} parent=0
    _
  %s10 = ssub.s32 1, %s8
  %s11 = scalar_select 0, %s10, %s8
  $region1: #{_sae_forward.1} parent=0
    #allocation3 [shape = 'u8[131072]{0}', space=vmem, size = 0x20000, scoped, tag = 'input window, operand 1, single buffered']
    #allocation4 [shape = 's32[1]{0}', space=sflag, size = 0x4, scoped, tag = 'scoped memory for _sae_forward.1']
    #allocation5 [shape = 's32[1]{0}', space=sflag, size = 0x4, scoped, tag = 'scoped memory for _sae_forward.1']
    #allocation6 [shape = 'u8[131072]{0}', space=vmem, size = 0x20000, scoped, tag = 'input window, operand 3, single buffered']
    #allocation7 [shape = 's32[1]{0}', space=sflag, size = 0x4, scoped, tag = 'scoped memory for _sae_forward.1']
    #allocation8 [shape = 'u8[8192]{0}', space=vmem, size = 0x2000, scoped, tag = 'output window, operand 0, single buffered']
    #allocation9 [shape = 'u8[16384]{0}', space=vmem, size = 0x4000, scoped, tag = 'output window, operand 1, single buffered']
    #allocation10 [shape = 's32[1]{0}', space=sflag, size = 0x4, scoped, tag = 'scoped memory for _sae_forward.1']
    %12 = vsyncpa [#allocation4], 0
    %13 = vsyncpa [#allocation7], 0
    %14 = vsyncpa [#allocation5], 0
    %15 = vsyncpa [#allocation10], 0
    // Predicated region
    $region2: #{_sae_forward.1} parent=1 // pred_check
      _
    $region3: #{_sae_forward.1} parent=1 // pred_check_branch
      %17 = sbr.rel (0) target = $region5
    $region4: #{_sae_forward.1} parent=1 // pred_region
      _
    $region5: #{_sae_forward.1} parent=1 // pred_fallthru
      _
    // Predicated region
    $region6: #{_sae_forward.1} parent=1 // pred_check
      _
    $region7: #{_sae_forward.1} parent=1 // pred_check_branch
      %19 = sbr.rel (0) target = $region9
    $region8: #{_sae_forward.1} parent=1 // pred_region
      %s21 = ssub.s32 4096, 4096
      %22 = vsyncadd [#allocation4], %s21
      %s23 = sshll.u32 [#allocation3], 4
      %s24 = int_to_ptr.vmem [resolvable:$true] %s23
      %29 = dma.hbm_to_vmem [thread:$0]  %s1, 4096, %s24, [#allocation4], 256, 256, 16
    $region9: #{_sae_forward.1} parent=1 // pred_fallthru
      _
    // Predicated region
    $region10: #{_sae_forward.1} parent=1 // pred_check
      _
    $region11: #{_sae_forward.1} parent=1 // pred_check_branch
      %31 = sbr.rel (0) target = $region13
    $region12: #{_sae_forward.1} parent=1 // pred_region
      _
    $region13: #{_sae_forward.1} parent=1 // pred_fallthru
      _
    // Predicated region
    $region14: #{_sae_forward.1} parent=1 // pred_check
      _
    $region15: #{_sae_forward.1} parent=1 // pred_check_branch
      %33 = sbr.rel (0) target = $region17
    $region16: #{_sae_forward.1} parent=1 // pred_region
      %s35 = ssub.s32 4096, 4096
      %36 = vsyncadd [#allocation7], %s35
      %s37 = sshll.u32 [#allocation6], 4
      %s38 = int_to_ptr.vmem [resolvable:$true] %s37
      %43 = dma.hbm_to_vmem [thread:$0]  %s3, 4096, %s38, [#allocation7], 128, 128, 8
    $region17: #{_sae_forward.1} parent=1 // pred_fallthru
      _
    // Predicated region
    $region18: #{_sae_forward.1} parent=1 // pred_check
      _
    $region19: #{_sae_forward.1} parent=1 // pred_check_branch
      %45 = sbr.rel (0) target = $region21
    $region20: #{_sae_forward.1} parent=1 // pred_region
      _
    $region21: #{_sae_forward.1} parent=1 // pred_fallthru
      _
    // Predicated region
    $region22: #{_sae_forward.1} parent=1 // pred_check
      _
    $region23: #{_sae_forward.1} parent=1 // pred_check_branch
      %47 = sbr.rel (0) target = $region25
    $region24: #{_sae_forward.1} parent=1 // pred_region
      %48 = dma.done [#allocation4], 4096
    $region25: #{_sae_forward.1} parent=1 // pred_fallthru
      _
    // Predicated region
    $region26: #{_sae_forward.1} parent=1 // pred_check
      _
    $region27: #{_sae_forward.1} parent=1 // pred_check_branch
      %50 = sbr.rel (0) target = $region29
    $region28: #{_sae_forward.1} parent=1 // pred_region
      %51 = dma.done [#allocation7], 4096
    $region29: #{_sae_forward.1} parent=1 // pred_fallthru
      _
    %v52 = vld [vmem:[%s0] sm:$0xff]
    %v53 = vld [vmem:[%s0 + $0x8] sm:$0xff]
    %v54 = vld [vmem:[%s4] sm:$0x1]
    %v56 = vlaneseq
    %v57 = vshrl.u32 %v56, 7
    %v58 = vsub.s32 0, %v57
    %v59 = vrot.slane %v54, %v58
    %v61 = vsub.f32 %v52, %v59
    %v62 = vsub.f32 %v53, %v59
    %v63 = vld [vmem:[#allocation3] sm:$0xff]
    %v64 = vld [vmem:[#allocation3 + $0x8] sm:$0xff]
    %v65 = vld [vmem:[#allocation3 + $0x10] sm:$0xff]
    %v66 = vld [vmem:[#allocation3 + $0x18] sm:$0xff]
    %v67 = vld [vmem:[#allocation3 + $0x20] sm:$0xff]
    %v68 = vld [vmem:[#allocation3 + $0x28] sm:$0xff]
    %v69 = vld [vmem:[#allocation3 + $0x30] sm:$0xff]
    %v70 = vld [vmem:[#allocation3 + $0x38] sm:$0xff]
    %v71 = vld [vmem:[#allocation3 + $0x40] sm:$0xff]
    %v72 = vld [vmem:[#allocation3 + $0x48] sm:$0xff]
    %v73 = vld [vmem:[#allocation3 + $0x50] sm:$0xff]
    %v74 = vld [vmem:[#allocation3 + $0x58] sm:$0xff]
    %v75 = vld [vmem:[#allocation3 + $0x60] sm:$0xff]
    %v76 = vld [vmem:[#allocation3 + $0x68] sm:$0xff]
    %v77 = vld [vmem:[#allocation3 + $0x70] sm:$0xff]
    %v78 = vld [vmem:[#allocation3 + $0x78] sm:$0xff]
    %v79 = vld [vmem:[#allocation3 + $0x80] sm:$0xff]
    %v80 = vld [vmem:[#allocation3 + $0x88] sm:$0xff]
    %v81 = vld [vmem:[#allocation3 + $0x90] sm:$0xff]
    %v82 = vld [vmem:[#allocation3 + $0x98] sm:$0xff]
    %v83 = vld [vmem:[#allocation3 + $0xa0] sm:$0xff]
    %v84 = vld [vmem:[#allocation3 + $0xa8] sm:$0xff]
    %v85 = vld [vmem:[#allocation3 + $0xb0] sm:$0xff]
    %v86 = vld [vmem:[#allocation3 + $0xb8] sm:$0xff]
    %v87 = vld [vmem:[#allocation3 + $0xc0] sm:$0xff]
    %v88 = vld [vmem:[#allocation3 + $0xc8] sm:$0xff]
    %v89 = vld [vmem:[#allocation3 + $0xd0] sm:$0xff]
    %v90 = vld [vmem:[#allocation3 + $0xd8] sm:$0xff]
    %v91 = vld [vmem:[#allocation3 + $0xe0] sm:$0xff]
    %v92 = vld [vmem:[#allocation3 + $0xe8] sm:$0xff]
    %v93 = vld [vmem:[#allocation3 + $0xf0] sm:$0xff]
    %v94 = vld [vmem:[#allocation3 + $0xf8] sm:$0xff]
    %v95 = vld [vmem:[%s2] sm:$0x3]
    %v97 = vlaneseq
    %v98 = vshrl.u32 %v97, 7
    %v99 = vsub.s32 0, %v98
    %v100 = vrot.slane %v95, %v99
    %v101 = vlaneseq
    %v102 = vshrl.u32 %v101, 7
    %v103 = vsub.s32 1, %v102
    %v104 = vrot.slane %v95, %v103
    %107 = vmatprep.subr.mxu0 %v64
    %108 = vmatpush1.msra.mxu0 %v63
    %109 = vmatprep.subr.mxu0 %v66
    %110 = vmatpush1.msra.mxu0 %v65
    %111 = vmatprep.subr.mxu0 %v68
    %112 = vmatpush1.msra.mxu0 %v67
    %113 = vmatprep.subr.mxu0 %v70
    %114 = vmatpush1.msra.mxu0 %v69
    %115 = vmatprep.subr.mxu0 %v72
    %116 = vmatpush1.msra.mxu0 %v71
    %117 = vmatprep.subr.mxu0 %v74
    %118 = vmatpush1.msra.mxu0 %v73
    %119 = vmatprep.subr.mxu0 %v76
    %120 = vmatpush1.msra.mxu0 %v75
    %121 = vmatprep.subr.mxu0 %v78
    %122 = vmatpush1.msra.mxu0 %v77
    %123 = vmatprep.subr.mxu0 %v80
    %124 = vmatpush1.msra.mxu0 %v79
    %125 = vmatprep.subr.mxu0 %v82
    %126 = vmatpush1.msra.mxu0 %v81
    %127 = vmatprep.subr.mxu0 %v84
    %128 = vmatpush1.msra.mxu0 %v83
    %129 = vmatprep.subr.mxu0 %v86
    %130 = vmatpush1.msra.mxu0 %v85
    %131 = vmatprep.subr.mxu0 %v88
    %132 = vmatpush1.msra.mxu0 %v87
    %133 = vmatprep.subr.mxu0 %v90
    %134 = vmatpush1.msra.mxu0 %v89
    %135 = vmatprep.subr.mxu0 %v92
    %136 = vmatpush1.msra.mxu0 %v91
    %137 = vmatprep.subr.mxu0 %v94
    %138 = vmatpush1.msra.mxu0 %v93
    %139 = vmatprep.subr.mxu0 0.0
    %140 = vmatpush1.msra.mxu0 0.0
    %141 = vmatprep.subr.mxu0 0.0
    %142 = vmatpush1.msra.mxu0 0.0
    %143 = vmatprep.subr.mxu0 0.0
    %144 = vmatpush1.msra.mxu0 0.0
    %145 = vmatprep.subr.mxu0 0.0
    %146 = vmatpush1.msra.mxu0 0.0
    %147 = vmatprep.subr.mxu0 0.0
    %148 = vmatpush1.msra.mxu0 0.0
    %149 = vmatprep.subr.mxu0 0.0
    %150 = vmatpush1.msra.mxu0 0.0
    %151 = vmatprep.subr.mxu0 0.0
    %152 = vmatpush1.msra.mxu0 0.0
    %153 = vmatprep.subr.mxu0 0.0
    %154 = vmatpush1.msra.mxu0 0.0
    %155 = vmatprep.subr.mxu0 0.0
    %156 = vmatpush1.msra.mxu0 0.0
    %157 = vmatprep.subr.mxu0 0.0
    %158 = vmatpush1.msra.mxu0 0.0
    %159 = vmatprep.subr.mxu0 0.0
    %160 = vmatpush1.msra.mxu0 0.0
    %161 = vmatprep.subr.mxu0 0.0
    %162 = vmatpush1.msra.mxu0 0.0
    %163 = vmatprep.subr.mxu0 0.0
    %164 = vmatpush1.msra.mxu0 0.0
    %165 = vmatprep.subr.mxu0 0.0
    %166 = vmatpush1.msra.mxu0 0.0
    %167 = vmatprep.subr.mxu0 0.0
    %168 = vmatpush1.msra.mxu0 0.0
    %169 = vmatprep.subr.mxu0 0.0
    %170 = vmatpush1.msra.mxu0 0.0
    %171 = vmatprep.mubr.f32.mxu0 0.0
    %172 = vmatmul.mubr.f32.gmra.mrb[0].mxu0 %v61
    %v173 = vpop.f32.mrb[0].mxu0
    %v174 = vadd.f32 %v100, %v173
    %v175 = vpop.f32.mrb[0].mxu0
    %v176 = vadd.f32 %v104, %v175
    %177 = vmatprep.mubr.f32.mxu0 0.0
    %178 = vmatmul.mubr.f32.gmra.mrb[0].mxu0 %v62
    %v179 = vpop.f32.mrb[0].mxu0
    %v180 = vadd.f32 %v100, %v179
    %v181 = vpop.f32.mrb[0].mxu0
    %v182 = vadd.f32 %v104, %v181
    %183 = vdwg.mxu0
    %v184 = vmax.f32 %v174, 0.0
    %v185 = vmax.f32 %v176, 0.0
    %v186 = vmax.f32 %v180, 0.0
    %v187 = vmax.f32 %v182, 0.0
    %188 = vst [vmem:[#allocation9] sm:$0xff] %v184
    %189 = vst [vmem:[#allocation9 + $0x8] sm:$0xff] %v185
    %190 = vst [vmem:[#allocation9 + $0x10] sm:$0xff] %v186
    %191 = vst [vmem:[#allocation9 + $0x18] sm:$0xff] %v187
    %p192 = scmp.eq.s32.totalorder 0, 0
    // Predicated region
    $region30: #{_sae_forward.1} parent=1 // pred_check
      %p193 = pneg %p192
    $region31: #{_sae_forward.1} parent=1 // pred_check_branch
      %195 = sbr.rel (%p193) target = $region33
    $region32: #{_sae_forward.1} parent=1 // pred_region
      %196 = vst [vmem:[#allocation2] sm:$0xff] %v59
      %197 = vst [vmem:[#allocation2 + $0x8] sm:$0xff] %v59
    $region33: #{_sae_forward.1} parent=1 // pred_fallthru
      _
    %v198 = vld [vmem:[#allocation2] sm:$0xff]
    %v199 = vld [vmem:[#allocation2 + $0x8] sm:$0xff]
    %v200 = vld [vmem:[#allocation6] sm:$0xff]
    %v201 = vld [vmem:[#allocation6 + $0x8] sm:$0xff]
    %v202 = vld [vmem:[#allocation6 + $0x10] sm:$0xff]
    %v203 = vld [vmem:[#allocation6 + $0x18] sm:$0xff]
    %v204 = vld [vmem:[#allocation6 + $0x20] sm:$0xff]
    %v205 = vld [vmem:[#allocation6 + $0x28] sm:$0xff]
    %v206 = vld [vmem:[#allocation6 + $0x30] sm:$0xff]
    %v207 = vld [vmem:[#allocation6 + $0x38] sm:$0xff]
    %v208 = vld [vmem:[#allocation6 + $0x40] sm:$0xff]
    %v209 = vld [vmem:[#allocation6 + $0x48] sm:$0xff]
    %v210 = vld [vmem:[#allocation6 + $0x50] sm:$0xff]
    %v211 = vld [vmem:[#allocation6 + $0x58] sm:$0xff]
    %v212 = vld [vmem:[#allocation6 + $0x60] sm:$0xff]
    %v213 = vld [vmem:[#allocation6 + $0x68] sm:$0xff]
    %v214 = vld [vmem:[#allocation6 + $0x70] sm:$0xff]
    %v215 = vld [vmem:[#allocation6 + $0x78] sm:$0xff]
    %v216 = vld [vmem:[#allocation6 + $0x80] sm:$0xff]
    %v217 = vld [vmem:[#allocation6 + $0x88] sm:$0xff]
    %v218 = vld [vmem:[#allocation6 + $0x90] sm:$0xff]
    %v219 = vld [vmem:[#allocation6 + $0x98] sm:$0xff]
    %v220 = vld [vmem:[#allocation6 + $0xa0] sm:$0xff]
    %v221 = vld [vmem:[#allocation6 + $0xa8] sm:$0xff]
    %v222 = vld [vmem:[#allocation6 + $0xb0] sm:$0xff]
    %v223 = vld [vmem:[#allocation6 + $0xb8] sm:$0xff]
    %v224 = vld [vmem:[#allocation6 + $0xc0] sm:$0xff]
    %v225 = vld [vmem:[#allocation6 + $0xc8] sm:$0xff]
    %v226 = vld [vmem:[#allocation6 + $0xd0] sm:$0xff]
    %v227 = vld [vmem:[#allocation6 + $0xd8] sm:$0xff]
    %v228 = vld [vmem:[#allocation6 + $0xe0] sm:$0xff]
    %v229 = vld [vmem:[#allocation6 + $0xe8] sm:$0xff]
    %v230 = vld [vmem:[#allocation6 + $0xf0] sm:$0xff]
    %v231 = vld [vmem:[#allocation6 + $0xf8] sm:$0xff]
    %232 = vmatprep.subr.mxu0 0.0
    %233 = vmatpush1.msra.mxu0 %v200
    %234 = vmatprep.subr.mxu0 0.0
    %235 = vmatpush1.msra.mxu0 %v201
    %236 = vmatprep.subr.mxu0 0.0
    %237 = vmatpush1.msra.mxu0 %v202
    %238 = vmatprep.subr.mxu0 0.0
    %239 = vmatpush1.msra.mxu0 %v203
    %240 = vmatprep.subr.mxu0 0.0
    %241 = vmatpush1.msra.mxu0 %v204
    %242 = vmatprep.subr.mxu0 0.0
    %243 = vmatpush1.msra.mxu0 %v205
    %244 = vmatprep.subr.mxu0 0.0
    %245 = vmatpush1.msra.mxu0 %v206
    %246 = vmatprep.subr.mxu0 0.0
    %247 = vmatpush1.msra.mxu0 %v207
    %248 = vmatprep.subr.mxu0 0.0
    %249 = vmatpush1.msra.mxu0 %v208
    %250 = vmatprep.subr.mxu0 0.0
    %251 = vmatpush1.msra.mxu0 %v209
    %252 = vmatprep.subr.mxu0 0.0
    %253 = vmatpush1.msra.mxu0 %v210
    %254 = vmatprep.subr.mxu0 0.0
    %255 = vmatpush1.msra.mxu0 %v211
    %256 = vmatprep.subr.mxu0 0.0
    %257 = vmatpush1.msra.mxu0 %v212
    %258 = vmatprep.subr.mxu0 0.0
    %259 = vmatpush1.msra.mxu0 %v213
    %260 = vmatprep.subr.mxu0 0.0
    %261 = vmatpush1.msra.mxu0 %v214
    %262 = vmatprep.subr.mxu0 0.0
    %263 = vmatpush1.msra.mxu0 %v215
    %264 = vmatprep.subr.mxu0 0.0
    %265 = vmatpush1.msra.mxu0 %v216
    %266 = vmatprep.subr.mxu0 0.0
    %267 = vmatpush1.msra.mxu0 %v217
    %268 = vmatprep.subr.mxu0 0.0
    %269 = vmatpush1.msra.mxu0 %v218
    %270 = vmatprep.subr.mxu0 0.0
    %271 = vmatpush1.msra.mxu0 %v219
    %272 = vmatprep.subr.mxu0 0.0
    %273 = vmatpush1.msra.mxu0 %v220
    %274 = vmatprep.subr.mxu0 0.0
    %275 = vmatpush1.msra.mxu0 %v221
    %276 = vmatprep.subr.mxu0 0.0
    %277 = vmatpush1.msra.mxu0 %v222
    %278 = vmatprep.subr.mxu0 0.0
    %279 = vmatpush1.msra.mxu0 %v223
    %280 = vmatprep.subr.mxu0 0.0
    %281 = vmatpush1.msra.mxu0 %v224
    %282 = vmatprep.subr.mxu0 0.0
    %283 = vmatpush1.msra.mxu0 %v225
    %284 = vmatprep.subr.mxu0 0.0
    %285 = vmatpush1.msra.mxu0 %v226
    %286 = vmatprep.subr.mxu0 0.0
    %287 = vmatpush1.msra.mxu0 %v227
    %288 = vmatprep.subr.mxu0 0.0
    %289 = vmatpush1.msra.mxu0 %v228
    %290 = vmatprep.subr.mxu0 0.0
    %291 = vmatpush1.msra.mxu0 %v229
    %292 = vmatprep.subr.mxu0 0.0
    %293 = vmatpush1.msra.mxu0 %v230
    %294 = vmatprep.subr.mxu0 0.0
    %295 = vmatpush1.msra.mxu0 %v231
    %296 = vmatprep.mubr.f32.mxu0 %v185
    %297 = vmatmul.mubr.f32.gmra.mrb[0].mxu0 %v184
    %v298 = vpop.f32.mrb[0].mxu0
    %v299 = vadd.f32 0.0, %v298
    %v300 = vpop.f32.mrb[0].mxu0
    %301 = vmatprep.mubr.f32.mxu0 %v187
    %302 = vmatmul.mubr.f32.gmra.mrb[0].mxu0 %v186
    %v303 = vpop.f32.mrb[0].mxu0
    %v304 = vadd.f32 0.0, %v303
    %v305 = vpop.f32.mrb[0].mxu0
    %306 = vdwg.mxu0
    %v307 = vadd.f32 %v198, %v299
    %v308 = vadd.f32 %v199, %v304
    %309 = vst [vmem:[#allocation2] sm:$0xff] %v307
    %310 = vst [vmem:[#allocation2 + $0x8] sm:$0xff] %v308
    // Predicated region
    $region34: #{_sae_forward.1} parent=1 // pred_check
      %p311 = pneg %p192
    $region35: #{_sae_forward.1} parent=1 // pred_check_branch
      %313 = sbr.rel (%p311) target = $region37
    $region36: #{_sae_forward.1} parent=1 // pred_region
      %v314 = vld [vmem:[#allocation2] sm:$0xff]
      %v315 = vld [vmem:[#allocation2 + $0x8] sm:$0xff]
      %316 = vst [vmem:[#allocation8] sm:$0xff] %v314
      %317 = vst [vmem:[#allocation8 + $0x8] sm:$0xff] %v315
    $region37: #{_sae_forward.1} parent=1 // pred_fallthru
      _
    // Predicated region
    $region38: #{_sae_forward.1} parent=1 // pred_check
      _
    $region39: #{_sae_forward.1} parent=1 // pred_check_branch
      %319 = sbr.rel (0) target = $region41
    $region40: #{_sae_forward.1} parent=1 // pred_region
      %s321 = ssub.s32 256, 256
      %322 = vsyncadd [#allocation5], %s321
      %s323 = sshll.u32 [#allocation8], 4
      %s324 = int_to_ptr.vmem [resolvable:$true] %s323
      %329 = dma.vmem_to_hbm [thread:$0]  %s324, 256, %s5, [#allocation5], 128, 128, 8
    $region41: #{_sae_forward.1} parent=1 // pred_fallthru
      _
    // Predicated region
    $region42: #{_sae_forward.1} parent=1 // pred_check
      _
    $region43: #{_sae_forward.1} parent=1 // pred_check_branch
      %331 = sbr.rel (0) target = $region45
    $region44: #{_sae_forward.1} parent=1 // pred_region
      %s333 = ssub.s32 512, 512
      %334 = vsyncadd [#allocation10], %s333
      %s335 = sshll.u32 [#allocation9], 4
      %s336 = int_to_ptr.vmem [resolvable:$true] %s335
      %341 = dma.vmem_to_hbm [thread:$0]  %s336, 512, %s6, [#allocation10], 256, 256, 16
    $region45: #{_sae_forward.1} parent=1 // pred_fallthru
      _
    // Predicated region
    $region46: #{_sae_forward.1} parent=1 // pred_check
      _
    $region47: #{_sae_forward.1} parent=1 // pred_check_branch
      %343 = sbr.rel (0) target = $region49
    $region48: #{_sae_forward.1} parent=1 // pred_region
      %344 = dma.done [#allocation5], 256
    $region49: #{_sae_forward.1} parent=1 // pred_fallthru
      _
    // Predicated region
    $region50: #{_sae_forward.1} parent=1 // pred_check
      _
    $region51: #{_sae_forward.1} parent=1 // pred_check_branch
      %346 = sbr.rel (0) target = $region53
    $region52: #{_sae_forward.1} parent=1 // pred_region
      %347 = dma.done [#allocation10], 512
    $region53: #{_sae_forward.1} parent=1 // pred_fallthru
      _
    %348 = vsyncpa [#allocation4], 1
    %349 = vsyncpa [#allocation7], 1
    %350 = vsyncpa [#allocation5], 1
    %351 = vsyncpa [#allocation10], 1

</llo_original>
